<compile_context>
chip_gen: v5e
topology: v5e:2x2
jax: 0.10.0
libtpu: 0.0.40
codegen_flags: <defaults>
</compile_context>

<pallas_src>
import jax
import jax.numpy as jnp
from jax.experimental import pallas as pl
from jax.experimental.pallas import tpu as pltpu


DROP_P = 0.7                         # torch F.dropout(p=0.7, training=True)
KEEP_P = 1.0 - DROP_P                # keep probability = 0.3
KEEP_THRESH = int(KEEP_P * (1 << 32))  # uint32 threshold: P(bits < thresh) = KEEP_P
HIDDEN1, HIDDEN2 = 128, 64


def _round_up(x, m):
    return ((x + m - 1) // m) * m


def mlp_kernel(x_ref,                 # (TB, in_dim)   f32
               bits_ref,              # (TB, 128)      uint32 dropout randoms
               w1_ref, b1_ref,        # (in_dim, 128) bf16, (1, 128) f32
               w2_ref, b2_ref,        # (128, 64)     bf16, (1, 64)  f32
               w3_ref, b3_ref,        # (64, out_dim) bf16, (1, out_dim) f32
               o_ref):                # (TB, out_dim)  f32
    # ---- layer1 + ReLU: bf16 x bf16 -> f32 accumulate on the MXU ----
    x = x_ref[...].astype(jnp.bfloat16)
    h1 = jnp.dot(x, w1_ref[...], preferred_element_type=jnp.float32) + b1_ref[...]
    h1 = jnp.maximum(h1, 0.0)

    # ---- dropout(p=0.7): keep w.p. 0.3, scale kept values by 1/0.3 ----
    keep = bits_ref[...] < jnp.uint32(KEEP_THRESH)
    h1 = jnp.where(keep, h1 * jnp.float32(1.0 / KEEP_P), jnp.float32(0.0))

    # ---- layer2 + ReLU ----
    h2 = (jnp.dot(h1.astype(jnp.bfloat16), w2_ref[...],
                  preferred_element_type=jnp.float32) + b2_ref[...])
    h2 = jnp.maximum(h2, 0.0)

    # ---- layer3 (no activation) ----
    out = (jnp.dot(h2.astype(jnp.bfloat16), w3_ref[...],
                   preferred_element_type=jnp.float32) + b3_ref[...])
    o_ref[...] = out.astype(o_ref.dtype)


def mlp_forward(x, params, dropout_key, *, block_b=256):
    """x: (B, in_dim) f32; params: dict w1,b1,w2,b2,w3,b3 (f32); dropout_key: PRNGKey."""
    B, in_dim = x.shape
    out_dim = params["w3"].shape[1]

    # Batch tile: multiple of 8 (f32 sublane), capped so even v7x's smaller VMEM
    # is comfortable; weights (<50 KB) stay resident across all grid steps.
    tb = min(block_b, _round_up(B, 8))
    b_pad = _round_up(B, tb)
    if b_pad != B:
        x = jnp.pad(x, ((0, b_pad - B), (0, 0)))

    # Per-row independent dropout randoms (uint32), generated once per call.
    bits = jax.random.bits(dropout_key, (b_pad, HIDDEN1), dtype=jnp.uint32)

    # Weights in bf16 (cast once, outside the hot loop); biases stay f32.
    w1 = params["w1"].astype(jnp.bfloat16)
    w2 = params["w2"].astype(jnp.bfloat16)
    w3 = params["w3"].astype(jnp.bfloat16)
    b1, b2, b3 = params["b1"], params["b2"], params["b3"]

    grid = (pl.cdiv(b_pad, tb),)

    tiled = lambda shape: pl.BlockSpec(shape, lambda i: (i, 0))      # batch-tiled
    resident = lambda shape: pl.BlockSpec(shape, lambda i: (0, 0))   # VMEM-resident

    out = pl.pallas_call(
        mlp_kernel,
        out_shape=jax.ShapeDtypeStruct((b_pad, out_dim), jnp.float32),
        grid=grid,
        in_specs=[
            tiled((tb, in_dim)),            # x
            tiled((tb, HIDDEN1)),           # dropout bits
            resident((in_dim, HIDDEN1)),    # w1
            resident((1, HIDDEN1)),         # b1
            resident((HIDDEN1, HIDDEN2)),   # w2
            resident((1, HIDDEN2)),         # b2
            resident((HIDDEN2, out_dim)),   # w3
            resident((1, out_dim)),         # b3
        ],
        out_specs=tiled((tb, out_dim)),
        compiler_params=pltpu.CompilerParams(
            dimension_semantics=("parallel",)),
    )(x, bits, w1, b1, w2, b2, w3, b3)

    return out[:B]


def init_params(key, in_dim, out_dim):
    """Deterministic init mimicking nn.Linear's U(-1/sqrt(fan_in), 1/sqrt(fan_in))."""
    dims = [(in_dim, HIDDEN1), (HIDDEN1, HIDDEN2), (HIDDEN2, out_dim)]
    params = {}
    for i, (fan_in, fan_out) in enumerate(dims, start=1):
        key, kw, kb = jax.random.split(key, 3)
        bound = 1.0 / (fan_in ** 0.5)
        params[f"w{i}"] = jax.random.uniform(
            kw, (fan_in, fan_out), jnp.float32, -bound, bound)
        params[f"b{i}"] = jax.random.uniform(
            kb, (1, fan_out), jnp.float32, -bound, bound)
    return params


if __name__ == "__main__":
    in_dim, out_dim, batch = 32, 8, 8

    key = jax.random.PRNGKey(0)
    key, kx, kdrop = jax.random.split(key, 3)
    x = jax.random.normal(kx, (batch, in_dim), dtype=jnp.float32)
    params = init_params(key, in_dim, out_dim)

    out = mlp_forward(x, params, kdrop)
    jax.block_until_ready(out)
    assert out.shape == (batch, out_dim)
    assert bool(jnp.all(jnp.isfinite(out)))
    print("KERNEL_OK")
</pallas_src>

<mosaic_0001>
module attributes {stable_mosaic.version = 11 : i64} {
  func.func @mlp_kernel(%arg0: i32, %arg1: memref<8x32xf32, #tpu.memory_space<vmem>>, %arg2: memref<8x128xi32, #tpu.memory_space<vmem>>, %arg3: memref<32x128xbf16, #tpu.memory_space<vmem>>, %arg4: memref<1x128xf32, #tpu.memory_space<vmem>>, %arg5: memref<128x64xbf16, #tpu.memory_space<vmem>>, %arg6: memref<1x64xf32, #tpu.memory_space<vmem>>, %arg7: memref<64x8xbf16, #tpu.memory_space<vmem>>, %arg8: memref<1x8xf32, #tpu.memory_space<vmem>>, %arg9: memref<8x8xf32, #tpu.memory_space<vmem>>) attributes {dimension_semantics = [#tpu.dimension_semantics<parallel>], iteration_bounds = array<i64: 1>, scalar_prefetch = 0 : i64, scratch_operands = 0 : i64, tpu.core_type = #tpu.core_type<tc>, window_params = [{transform_indices = @transform_0, window_bounds = array<i64: 8, 32>}, {transform_indices = @transform_1, window_bounds = array<i64: 8, 128>}, {pipeline_mode = #tpu.pipeline_mode<synchronous>, transform_indices = @transform_2, window_bounds = array<i64: 32, 128>}, {pipeline_mode = #tpu.pipeline_mode<synchronous>, transform_indices = @transform_3, window_bounds = array<i64: 1, 128>}, {pipeline_mode = #tpu.pipeline_mode<synchronous>, transform_indices = @transform_4, window_bounds = array<i64: 128, 64>}, {pipeline_mode = #tpu.pipeline_mode<synchronous>, transform_indices = @transform_5, window_bounds = array<i64: 1, 64>}, {pipeline_mode = #tpu.pipeline_mode<synchronous>, transform_indices = @transform_6, window_bounds = array<i64: 64, 8>}, {pipeline_mode = #tpu.pipeline_mode<synchronous>, transform_indices = @transform_7, window_bounds = array<i64: 1, 8>}, {transform_indices = @transform_8, window_bounds = array<i64: 8, 8>}]} {
    %c0 = arith.constant 0 : index
    %c0_0 = arith.constant 0 : index
    %0 = vector.load %arg1[%c0, %c0_0] : memref<8x32xf32, #tpu.memory_space<vmem>>, vector<8x32xf32>
    %1 = arith.truncf %0 : vector<8x32xf32> to vector<8x32xbf16>
    %c0_1 = arith.constant 0 : index
    %c0_2 = arith.constant 0 : index
    %2 = vector.load %arg3[%c0_1, %c0_2] : memref<32x128xbf16, #tpu.memory_space<vmem>>, vector<32x128xbf16>
    %cst = arith.constant dense<0.000000e+00> : vector<8x128xf32>
    %3 = tpu.matmul %1, %2, %cst {dimension_numbers = #tpu.dot_dimension_numbers<[1], [0], [0], [1], [0, 0, 1, 1], [], []>} : vector<8x32xbf16>, vector<32x128xbf16>, vector<8x128xf32> -> vector<8x128xf32>
    %c0_3 = arith.constant 0 : index
    %c0_4 = arith.constant 0 : index
    %4 = vector.load %arg4[%c0_3, %c0_4] : memref<1x128xf32, #tpu.memory_space<vmem>>, vector<1x128xf32>
    %5 = vector.broadcast %4 : vector<1x128xf32> to vector<8x128xf32>
    %6 = arith.addf %3, %5 : vector<8x128xf32>
    %cst_5 = arith.constant 0.000000e+00 : f32
    %7 = vector.broadcast %cst_5 : f32 to vector<8x128xf32>
    %8 = arith.maximumf %6, %7 : vector<8x128xf32>
    %c0_6 = arith.constant 0 : index
    %c0_7 = arith.constant 0 : index
    %9 = vector.load %arg2[%c0_6, %c0_7] : memref<8x128xi32, #tpu.memory_space<vmem>>, vector<8x128xi32>
    %c1288490188_i32 = arith.constant 1288490188 : i32
    %10 = vector.broadcast %c1288490188_i32 : i32 to vector<8x128xi32>
    %11 = arith.cmpi ult, %9, %10 : vector<8x128xi32>
    %cst_8 = arith.constant 3.33333325 : f32
    %12 = vector.broadcast %cst_8 : f32 to vector<8x128xf32>
    %13 = arith.mulf %8, %12 : vector<8x128xf32>
    %cst_9 = arith.constant 0.000000e+00 : f32
    %14 = vector.broadcast %cst_9 : f32 to vector<8x128xf32>
    %15 = arith.select %11, %13, %14 : vector<8x128xi1>, vector<8x128xf32>
    %16 = arith.truncf %15 : vector<8x128xf32> to vector<8x128xbf16>
    %c0_10 = arith.constant 0 : index
    %c0_11 = arith.constant 0 : index
    %17 = vector.load %arg5[%c0_10, %c0_11] : memref<128x64xbf16, #tpu.memory_space<vmem>>, vector<128x64xbf16>
    %cst_12 = arith.constant dense<0.000000e+00> : vector<8x64xf32>
    %18 = tpu.matmul %16, %17, %cst_12 {dimension_numbers = #tpu.dot_dimension_numbers<[1], [0], [0], [1], [0, 0, 1, 1], [], []>} : vector<8x128xbf16>, vector<128x64xbf16>, vector<8x64xf32> -> vector<8x64xf32>
    %c0_13 = arith.constant 0 : index
    %c0_14 = arith.constant 0 : index
    %19 = vector.load %arg6[%c0_13, %c0_14] : memref<1x64xf32, #tpu.memory_space<vmem>>, vector<1x64xf32>
    %20 = vector.broadcast %19 : vector<1x64xf32> to vector<8x64xf32>
    %21 = arith.addf %18, %20 : vector<8x64xf32>
    %cst_15 = arith.constant 0.000000e+00 : f32
    %22 = vector.broadcast %cst_15 : f32 to vector<8x64xf32>
    %23 = arith.maximumf %21, %22 : vector<8x64xf32>
    %24 = arith.truncf %23 : vector<8x64xf32> to vector<8x64xbf16>
    %c0_16 = arith.constant 0 : index
    %c0_17 = arith.constant 0 : index
    %25 = vector.load %arg7[%c0_16, %c0_17] : memref<64x8xbf16, #tpu.memory_space<vmem>>, vector<64x8xbf16>
    %cst_18 = arith.constant dense<0.000000e+00> : vector<8x8xf32>
    %26 = tpu.matmul %24, %25, %cst_18 {dimension_numbers = #tpu.dot_dimension_numbers<[1], [0], [0], [1], [0, 0, 1, 1], [], []>} : vector<8x64xbf16>, vector<64x8xbf16>, vector<8x8xf32> -> vector<8x8xf32>
    %c0_19 = arith.constant 0 : index
    %c0_20 = arith.constant 0 : index
    %27 = vector.load %arg8[%c0_19, %c0_20] : memref<1x8xf32, #tpu.memory_space<vmem>>, vector<1x8xf32>
    %28 = vector.broadcast %27 : vector<1x8xf32> to vector<8x8xf32>
    %29 = arith.addf %26, %28 : vector<8x8xf32>
    %c0_21 = arith.constant 0 : index
    %c0_22 = arith.constant 0 : index
    %30 = vector.load %arg9[%c0_21, %c0_22] : memref<8x8xf32, #tpu.memory_space<vmem>>, vector<8x8xf32>
    tpu.vector_store %arg9[%c0_21, %c0_22], %29 {strides = array<i32>} : memref<8x8xf32, #tpu.memory_space<vmem>>, vector<8x8xf32>,
    return
  }
  func.func @transform_0(%arg0: i32) -> (i32, i32) {
    %c0_i32 = arith.constant 0 : i32
    %c0_i32_0 = arith.constant 0 : i32
    return %arg0, %c0_i32 : i32, i32
  }
  func.func @transform_1(%arg0: i32) -> (i32, i32) {
    %c0_i32 = arith.constant 0 : i32
    %c0_i32_0 = arith.constant 0 : i32
    return %arg0, %c0_i32 : i32, i32
  }
  func.func @transform_2(%arg0: i32) -> (i32, i32) {
    %c0_i32 = arith.constant 0 : i32
    %c0_i32_0 = arith.constant 0 : i32
    %c0_i32_1 = arith.constant 0 : i32
    return %c0_i32, %c0_i32_0 : i32, i32
  }
  func.func @transform_3(%arg0: i32) -> (i32, i32) {
    %c0_i32 = arith.constant 0 : i32
    %c0_i32_0 = arith.constant 0 : i32
    %c0_i32_1 = arith.constant 0 : i32
    return %c0_i32, %c0_i32_0 : i32, i32
  }
  func.func @transform_4(%arg0: i32) -> (i32, i32) {
    %c0_i32 = arith.constant 0 : i32
    %c0_i32_0 = arith.constant 0 : i32
    %c0_i32_1 = arith.constant 0 : i32
    return %c0_i32, %c0_i32_0 : i32, i32
  }
  func.func @transform_5(%arg0: i32) -> (i32, i32) {
    %c0_i32 = arith.constant 0 : i32
    %c0_i32_0 = arith.constant 0 : i32
    %c0_i32_1 = arith.constant 0 : i32
    return %c0_i32, %c0_i32_0 : i32, i32
  }
  func.func @transform_6(%arg0: i32) -> (i32, i32) {
    %c0_i32 = arith.constant 0 : i32
    %c0_i32_0 = arith.constant 0 : i32
    %c0_i32_1 = arith.constant 0 : i32
    return %c0_i32, %c0_i32_0 : i32, i32
  }
  func.func @transform_7(%arg0: i32) -> (i32, i32) {
    %c0_i32 = arith.constant 0 : i32
    %c0_i32_0 = arith.constant 0 : i32
    %c0_i32_1 = arith.constant 0 : i32
    return %c0_i32, %c0_i32_0 : i32, i32
  }
  func.func @transform_8(%arg0: i32) -> (i32, i32) {
    %c0_i32 = arith.constant 0 : i32
    %c0_i32_0 = arith.constant 0 : i32
    return %arg0, %c0_i32 : i32, i32
  }
}

</mosaic_0001>

<llo_original>
// kernel: tpu_custom_call.1
$region0: #{tpu_custom_call.1}
  #allocation0 [shape = 'u32[]', space=smem, size = 0x4, offset = 0x4, fixed_abs, tag = 'smem constant byte address 0x4 - core index']
  #allocation1 [shape = 'u32[72,128]{1,0:T(1,128)}', space=vmem, size = 0x9000, scoped, tag = 'internal scratch']
  %s0 = inlined_call_operand.vmem [shape: f32[8,32], index: 0, kind: input, shape index: {}]
  %s1 = inlined_call_operand.vmem [shape: u32[8,128], index: 1, kind: input, shape index: {}]
  %s2 = inlined_call_operand.vmem [shape: bf16[32,128], index: 2, kind: input, shape index: {}]
  %s3 = inlined_call_operand.vmem [shape: f32[1,128], index: 3, kind: input, shape index: {}]
  %s4 = inlined_call_operand.vmem [shape: bf16[128,64], index: 4, kind: input, shape index: {}]
  %s5 = inlined_call_operand.vmem [shape: f32[1,64], index: 5, kind: input, shape index: {}]
  %s6 = inlined_call_operand.vmem [shape: bf16[64,8], index: 6, kind: input, shape index: {}]
  %s7 = inlined_call_operand.vmem [shape: f32[1,8], index: 7, kind: input, shape index: {}]
  %s8 = inlined_call_operand.hbm [shape: f32[8,8], index: 8, kind: output, shape index: {}]
  %s9 = sld [smem:[#allocation0]]
  $region42: #{tpu_custom_call.1} parent=0
    _
  %s11 = ssub.s32 1, %s9
  %s12 = scalar_select 0, %s11, %s9
  $region1: #{tpu_custom_call.1} parent=0
    #allocation2 [shape = 'u8[4096]{0}', space=vmem, size = 0x1000, scoped, tag = 'output window, operand 0, single buffered']
    #allocation3 [shape = 's32[1]{0}', space=sflag, size = 0x4, scoped, tag = 'scoped memory for tpu_custom_call.1']
    %13 = vsyncpa [#allocation3], 0
    // Predicated region
    $region2: #{tpu_custom_call.1} parent=1 // pred_check
      _
    $region3: #{tpu_custom_call.1} parent=1 // pred_check_branch
      %15 = sbr.rel (0) target = $region5
    $region4: #{tpu_custom_call.1} parent=1 // pred_region
      _
    $region5: #{tpu_custom_call.1} parent=1 // pred_fallthru
      _
    // Predicated region
    $region6: #{tpu_custom_call.1} parent=1 // pred_check
      _
    $region7: #{tpu_custom_call.1} parent=1 // pred_check_branch
      %17 = sbr.rel (0) target = $region9
    $region8: #{tpu_custom_call.1} parent=1 // pred_region
      _
    $region9: #{tpu_custom_call.1} parent=1 // pred_fallthru
      _
    // Predicated region
    $region10: #{tpu_custom_call.1} parent=1 // pred_check
      _
    $region11: #{tpu_custom_call.1} parent=1 // pred_check_branch
      %19 = sbr.rel (0) target = $region13
    $region12: #{tpu_custom_call.1} parent=1 // pred_region
      _
    $region13: #{tpu_custom_call.1} parent=1 // pred_fallthru
      _
    // Predicated region
    $region14: #{tpu_custom_call.1} parent=1 // pred_check
      _
    $region15: #{tpu_custom_call.1} parent=1 // pred_check_branch
      %21 = sbr.rel (0) target = $region17
    $region16: #{tpu_custom_call.1} parent=1 // pred_region
      _
    $region17: #{tpu_custom_call.1} parent=1 // pred_fallthru
      _
    // Predicated region
    $region18: #{tpu_custom_call.1} parent=1 // pred_check
      _
    $region19: #{tpu_custom_call.1} parent=1 // pred_check_branch
      %23 = sbr.rel (0) target = $region21
    $region20: #{tpu_custom_call.1} parent=1 // pred_region
      _
    $region21: #{tpu_custom_call.1} parent=1 // pred_fallthru
      _
    // Predicated region
    $region22: #{tpu_custom_call.1} parent=1 // pred_check
      _
    $region23: #{tpu_custom_call.1} parent=1 // pred_check_branch
      %25 = sbr.rel (0) target = $region25
    $region24: #{tpu_custom_call.1} parent=1 // pred_region
      _
    $region25: #{tpu_custom_call.1} parent=1 // pred_fallthru
      _
    // Predicated region
    $region26: #{tpu_custom_call.1} parent=1 // pred_check
      _
    $region27: #{tpu_custom_call.1} parent=1 // pred_check_branch
      %27 = sbr.rel (0) target = $region29
    $region28: #{tpu_custom_call.1} parent=1 // pred_region
      _
    $region29: #{tpu_custom_call.1} parent=1 // pred_fallthru
      _
    // Predicated region
    $region30: #{tpu_custom_call.1} parent=1 // pred_check
      _
    $region31: #{tpu_custom_call.1} parent=1 // pred_check_branch
      %29 = sbr.rel (0) target = $region33
    $region32: #{tpu_custom_call.1} parent=1 // pred_region
      _
    $region33: #{tpu_custom_call.1} parent=1 // pred_fallthru
      _
    %v31 = vld [vmem:[%s0] sm:$0xff]
    %v32 = vpack.c.bf16 %v31, %v31
    %v33 = vld [vmem:[%s2] sm:$0xf]
    %v34 = vld [vmem:[%s2 + $0x4] sm:$0xf]
    %v35 = vld [vmem:[%s2 + $0x8] sm:$0xf]
    %v36 = vld [vmem:[%s2 + $0xc] sm:$0xf]
    %v37 = vld [vmem:[%s3] sm:$0x1]
    %v39 = vperm.slane %v37, 0
    %v45 = vunpack.c.l.b16 %v33
    %v46 = vunpack.c.l.b16 %v34
    %v47 = vunpack.c.l.b16 %v35
    %v48 = vunpack.c.l.b16 %v36
    %v49 = vpack.c.b16 %v46, %v45
    %v50 = vpack.c.b16 %v48, %v47
    %vm53 = vcmask 261120
    %v55 = vsel %vm53, %v32, 0
    %57 = vmatpush.bf16.msra.mxu0 0
    %58 = vmatpush.bf16.msra.mxu0 0
    %59 = vmatpush.bf16.msra.mxu0 0
    %60 = vmatpush.bf16.msra.mxu0 0
    %61 = vmatpush.bf16.msra.mxu0 0
    %62 = vmatpush.bf16.msra.mxu0 0
    %63 = vmatpush.bf16.msra.mxu0 %v50
    %64 = vmatpush.bf16.msra.mxu0 %v49
    %65 = vmatmul.bf16.gmra.mxu0 %v55
    %v66 = vpop.f32.mrf.mxu0
    %v67 = vadd.f32 %v39, %v66
    %v68 = vpop.f32.mrf.mxu0
    %69 = vdwg.mxu0
    %v70 = vmax.f32 %v67, 0.0
    %v71 = vld [vmem:[%s1] sm:$0xff]
    %v72 = vadd.s32 %v71, 2147483648
    %vm74 = vcmp.lt.s32.totalorder %v72, 3435973836
    %v75 = vmul.f32 %v70, 3.3333333
    %v76 = vsel %vm74, %v75, 0.0
    %v77 = vpack.c.bf16 %v76, %v76
    %v78 = vld [vmem:[%s4] sm:$0xf]
    %v79 = vld [vmem:[%s4 + $0x4] sm:$0xf]
    %v80 = vld [vmem:[%s4 + $0x8] sm:$0xf]
    %v81 = vld [vmem:[%s4 + $0xc] sm:$0xf]
    %v82 = vld [vmem:[%s4 + $0x10] sm:$0xf]
    %v83 = vld [vmem:[%s4 + $0x14] sm:$0xf]
    %v84 = vld [vmem:[%s4 + $0x18] sm:$0xf]
    %v85 = vld [vmem:[%s4 + $0x1c] sm:$0xf]
    %v86 = vld [vmem:[%s4 + $0x20] sm:$0xf]
    %v87 = vld [vmem:[%s4 + $0x24] sm:$0xf]
    %v88 = vld [vmem:[%s4 + $0x28] sm:$0xf]
    %v89 = vld [vmem:[%s4 + $0x2c] sm:$0xf]
    %v90 = vld [vmem:[%s4 + $0x30] sm:$0xf]
    %v91 = vld [vmem:[%s4 + $0x34] sm:$0xf]
    %v92 = vld [vmem:[%s4 + $0x38] sm:$0xf]
    %v93 = vld [vmem:[%s4 + $0x3c] sm:$0xf]
    %v94 = vld [vmem:[%s5] sm:$0x1]
    %v96 = vperm.slane %v94, 0
    %v114 = vunpack.c.l.b16 %v78
    %v115 = vunpack.c.l.b16 %v79
    %v116 = vunpack.c.l.b16 %v80
    %v117 = vunpack.c.l.b16 %v81
    %v118 = vunpack.c.l.b16 %v82
    %v119 = vunpack.c.l.b16 %v83
    %v120 = vunpack.c.l.b16 %v84
    %v121 = vunpack.c.l.b16 %v85
    %v122 = vunpack.c.l.b16 %v86
    %v123 = vunpack.c.l.b16 %v87
    %v124 = vunpack.c.l.b16 %v88
    %v125 = vunpack.c.l.b16 %v89
    %v126 = vunpack.c.l.b16 %v90
    %v127 = vunpack.c.l.b16 %v91
    %v128 = vunpack.c.l.b16 %v92
    %v129 = vunpack.c.l.b16 %v93
    %v130 = vpack.c.b16 %v115, %v114
    %v131 = vpack.c.b16 %v117, %v116
    %v132 = vpack.c.b16 %v119, %v118
    %v133 = vpack.c.b16 %v121, %v120
    %v134 = vpack.c.b16 %v123, %v122
    %v135 = vpack.c.b16 %v125, %v124
    %v136 = vpack.c.b16 %v127, %v126
    %v137 = vpack.c.b16 %v129, %v128
    %146 = vmatpush.bf16.msra.mxu0 %v137
    %147 = vmatpush.bf16.msra.mxu0 %v136
    %148 = vmatpush.bf16.msra.mxu0 %v135
    %149 = vmatpush.bf16.msra.mxu0 %v134
    %150 = vmatpush.bf16.msra.mxu0 %v133
    %151 = vmatpush.bf16.msra.mxu0 %v132
    %152 = vmatpush.bf16.msra.mxu0 %v131
    %153 = vmatpush.bf16.msra.mxu0 %v130
    %154 = vmatmul.bf16.gmra.mxu0 %v77
    %v155 = vpop.f32.mrf.mxu0
    %v156 = vadd.f32 %v96, %v155
    %v157 = vpop.f32.mrf.mxu0
    %158 = vdwg.mxu0
    %v159 = vmax.f32 %v156, 0.0
    %v160 = vpack.c.bf16 %v159, %v159
    %v161 = vld [vmem:[%s6] sm:$0xf]
    %v162 = vld [vmem:[%s6 + $0x4] sm:$0xf]
    %v163 = vld [vmem:[%s6 + $0x8] sm:$0xf]
    %v164 = vld [vmem:[%s6 + $0xc] sm:$0xf]
    %v165 = vld [vmem:[%s6 + $0x10] sm:$0xf]
    %v166 = vld [vmem:[%s6 + $0x14] sm:$0xf]
    %v167 = vld [vmem:[%s6 + $0x18] sm:$0xf]
    %v168 = vld [vmem:[%s6 + $0x1c] sm:$0xf]
    %v169 = vld [vmem:[%s7] sm:$0x1]
    %v171 = vperm.slane %v169, 0
    %v181 = vunpack.c.l.b16 %v161
    %v182 = vunpack.c.l.b16 %v162
    %v183 = vunpack.c.l.b16 %v163
    %v184 = vunpack.c.l.b16 %v164
    %v185 = vunpack.c.l.b16 %v165
    %v186 = vunpack.c.l.b16 %v166
    %v187 = vunpack.c.l.b16 %v167
    %v188 = vunpack.c.l.b16 %v168
    %v189 = vpack.c.b16 %v182, %v181
    %v190 = vpack.c.b16 %v184, %v183
    %v191 = vpack.c.b16 %v186, %v185
    %v192 = vpack.c.b16 %v188, %v187
    %vm197 = vcmask 523264
    %v199 = vsel %vm197, %v160, 0
    %201 = vmatpush.bf16.msra.mxu0 0
    %202 = vmatpush.bf16.msra.mxu0 0
    %203 = vmatpush.bf16.msra.mxu0 0
    %204 = vmatpush.bf16.msra.mxu0 0
    %205 = vmatpush.bf16.msra.mxu0 %v192
    %206 = vmatpush.bf16.msra.mxu0 %v191
    %207 = vmatpush.bf16.msra.mxu0 %v190
    %208 = vmatpush.bf16.msra.mxu0 %v189
    %209 = vmatmul.bf16.gmra.mxu0 %v199
    %v210 = vpop.f32.mrf.mxu0
    %v211 = vadd.f32 %v171, %v210
    %v212 = vpop.f32.mrf.mxu0
    %213 = vdwg.mxu0
    %vm214 = vcmask 64512
    %215 = vst.msk [vmem:[#allocation2] sm:$0xff] %vm214, %v211
    // Predicated region
    $region34: #{tpu_custom_call.1} parent=1 // pred_check
      _
    $region35: #{tpu_custom_call.1} parent=1 // pred_check_branch
      %217 = sbr.rel (0) target = $region37
    $region36: #{tpu_custom_call.1} parent=1 // pred_region
      %219 = vsyncadd [#allocation3], 0
      %s221 = sshll.u32 [#allocation2], 4
      %s222 = int_to_ptr.vmem [resolvable:$true] %s221
      %s223 = sshll.u32 %s8, 4
      %s224 = int_to_ptr.hbm [resolvable:$true] %s223
      %226 = dma.vmem_to_hbm [thread:$0]  %s222, 128, %s224, [#allocation3]
    $region37: #{tpu_custom_call.1} parent=1 // pred_fallthru
      _
    // Predicated region
    $region38: #{tpu_custom_call.1} parent=1 // pred_check
      _
    $region39: #{tpu_custom_call.1} parent=1 // pred_check_branch
      %228 = sbr.rel (0) target = $region41
    $region40: #{tpu_custom_call.1} parent=1 // pred_region
      %230 = dma.done [#allocation3], 128
    $region41: #{tpu_custom_call.1} parent=1 // pred_fallthru
      _
    %231 = vsyncpa [#allocation3], 1

</llo_original>
